<compile_context>
chip_gen: v7x
topology: tpu7x:2x2x1
jax: 0.10.0
libtpu: 0.0.40
codegen_flags: <defaults>
</compile_context>

<pallas_src>
import functools

import jax
import jax.numpy as jnp
from jax.experimental import pallas as pl
from jax.experimental.pallas import tpu as pltpu


def _round_up(x, m):
    return ((x + m - 1) // m) * m


def _vmem_budget_bytes():
    """80% of this chip's physical VMEM (generation-aware soft budget)."""
    try:
        cap = pltpu.get_tpu_info().vmem_capacity_bytes
    except Exception:                      # query unavailable -> conservative
        cap = 64 << 20
    return int(cap * 0.8)


# ---------------------------------------------------------------------------
# Kernels
# ---------------------------------------------------------------------------

def _dist_linear_kernel(x_ref, wt_ref, o_ref, *, compute_dtype):
    """Full feature dim resident. grid = (row tiles, class tiles)."""
    # Row-normalize in f32: x / (||x|| + 1e-5), as in the PyTorch module.
    x = x_ref[...].astype(jnp.float32)
    ssq = jnp.sum(x * x, axis=1, keepdims=True)
    inv = pl.reciprocal(jnp.sqrt(ssq) + 1e-5, approx=True)       # EUP slot
    x_n = (x * inv).astype(compute_dtype)
    # scale_factor is already folded into wt in the wrapper.
    o_ref[...] = jnp.dot(x_n, wt_ref[...],
                         preferred_element_type=jnp.float32).astype(o_ref.dtype)


def _dist_linear_kernel_ktiled(x_ref, wt_ref, o_ref, acc_ref, ssq_ref, *,
                               compute_dtype):
    """K-tiled: grid = (row tiles, class tiles, K tiles); K is the reduction.

    The row norm is a per-row scalar, so normalizing after the reduction is
    exact: (x / n) @ W == (x @ W) / n.
    """
    k = pl.program_id(2)

    @pl.when(k == 0)
    def _():
        acc_ref[...] = jnp.zeros_like(acc_ref)
        ssq_ref[...] = jnp.zeros_like(ssq_ref)

    x = x_ref[...].astype(jnp.float32)
    ssq_ref[...] += jnp.sum(x * x, axis=1, keepdims=True)
    acc_ref[...] += jnp.dot(x.astype(compute_dtype), wt_ref[...],
                            preferred_element_type=jnp.float32)

    @pl.when(k == pl.num_programs(2) - 1)
    def _():
        inv = pl.reciprocal(jnp.sqrt(ssq_ref[...]) + 1e-5, approx=True)
        o_ref[...] = (acc_ref[...] * inv).astype(o_ref.dtype)


# ---------------------------------------------------------------------------
# Tiling selection (VMEM-budget aware)
# ---------------------------------------------------------------------------

def _pick_tiling(N, D, C, *, block_n, block_c, block_k,
                 x_itemsize, w_itemsize, o_itemsize, budget):
    bc = _round_up(min(block_c, _round_up(C, 128)), 128)
    c_pad = _round_up(C, bc)
    nj = c_pad // bc

    def need(bn, tk, nk):
        k_tiled = nk > 1
        x_bytes = 2 * bn * tk * x_itemsize                    # double-buffered
        w_bufs = 1 if (nj == 1 and nk == 1) else 2            # resident vs streamed
        w_bytes = w_bufs * tk * bc * w_itemsize
        o_bytes = 2 * bn * bc * o_itemsize
        scratch = (bn * bc + bn * 128) * 4 if k_tiled else 0  # f32 acc + row ssq
        return x_bytes + w_bytes + o_bytes + scratch

    if block_k is None:
        # Prefer no K tiling; otherwise the largest K tile that divides D.
        tk_cands = [D] + [t for t in (1024, 512, 256, 128) if t < D and D % t == 0]
    else:
        assert block_k == D or (D % block_k == 0 and block_k % 128 == 0), \
            "block_k must divide D and be a multiple of 128 (or equal D)"
        tk_cands = [block_k]

    bn_cands = []
    bn = max(8, min(_round_up(block_n, 8), _round_up(N, 8)))
    while True:
        bn_cands.append(bn)
        if bn <= 128:
            break
        bn = max(128, _round_up(bn // 2, 8))

    chosen = None
    for bn in bn_cands:          # prefer large row tiles ...
        for tk in tk_cands:      # ... and K tiling over shrinking them
            nk = D // tk
            chosen = (bn, tk, nk, need(bn, tk, nk))
            if chosen[-1] <= budget:
                return bc, c_pad, nj, bn, tk, nk, chosen[-1]
    bn, tk, nk, nb = chosen      # nothing met the soft budget: smallest config
    return bc, c_pad, nj, bn, tk, nk, nb


# ---------------------------------------------------------------------------
# Wrapper
# ---------------------------------------------------------------------------

def dist_linear(x, weight_v, weight_g, *, block_n=None, block_c=512,
                block_k=None, compute_dtype=jnp.bfloat16, out_dtype=None):
    N, D = x.shape
    C, D2 = weight_v.shape
    assert D == D2 and weight_g.shape == (C, 1)
    scale = 2.0 if C <= 200 else 10.0
    out_dtype = x.dtype if out_dtype is None else jnp.dtype(out_dtype)
    # TODO(synk): pass out_dtype=jnp.bfloat16 on v5e if the consumer accepts
    # bf16 logits (halves the output HBM write / vst traffic).

    # --- Weight-norm hoist (once, in the wrapper). scale folded in for free.
    v = weight_v.astype(jnp.float32)
    g = weight_g.astype(jnp.float32)
    v_norm = jnp.sqrt(jnp.sum(v * v, axis=1, keepdims=True))    # no eps (WeightNorm)
    w_t = (v * (g * scale / v_norm)).T.astype(compute_dtype)    # (D, C), MXU-native

    # --- Generation-aware tile selection and VMEM budget.
    budget = _vmem_budget_bytes()
    if block_n is None:
        block_n = 1024 if budget >= (96 << 20) else 512         # v5e/v6e vs v7x
    bc, c_pad, nj, bn, tk, nk, need = _pick_tiling(
        N, D, C, block_n=block_n, block_c=block_c, block_k=block_k,
        x_itemsize=jnp.dtype(x.dtype).itemsize,
        w_itemsize=jnp.dtype(compute_dtype).itemsize,
        o_itemsize=jnp.dtype(out_dtype).itemsize,
        budget=budget)
    vmem_limit = int(min(need + (8 << 20), budget))

    # --- Lane-dense class padding on the weight only (fuses into the weight-
    # norm compute). x is NOT padded: the grid uses cdiv over N and Pallas
    # masks the partial last row tile.
    if c_pad != C:
        w_t = jnp.pad(w_t, ((0, 0), (0, c_pad - C)))

    ni = pl.cdiv(N, bn)
    out_shape = jax.ShapeDtypeStruct((N, c_pad), out_dtype)

    if nk == 1:
        kernel = functools.partial(_dist_linear_kernel,
                                   compute_dtype=compute_dtype)

        def run(single_buffer_weight):
            w_kwargs = ({"pipeline_mode": pl.Buffered(1)}
                        if single_buffer_weight else {})
            return pl.pallas_call(
                kernel,
                out_shape=out_shape,
                grid_spec=pltpu.PrefetchScalarGridSpec(
                    num_scalar_prefetch=0,
                    grid=(ni, nj),
                    in_specs=[
                        pl.BlockSpec((bn, tk), lambda i, j: (i, 0)),   # x rows
                        pl.BlockSpec((tk, bc), lambda i, j: (0, j),    # weight
                                     **w_kwargs),
                    ],
                    out_specs=pl.BlockSpec((bn, bc), lambda i, j: (i, j)),
                ),
                compiler_params=pltpu.CompilerParams(
                    dimension_semantics=("parallel", "parallel"),
                    vmem_limit_bytes=vmem_limit),
            )(x, w_t)

        if nj == 1:
            # Resident weight (constant index map) is never re-fetched; a second
            # pipeline buffer is pure VMEM waste (critical under v7x's 64 MiB).
            try:
                out = run(single_buffer_weight=True)
            except Exception:        # jax without BlockSpec pipeline_mode support
                out = run(single_buffer_weight=False)
        else:
            out = run(single_buffer_weight=False)
    else:
        kernel = functools.partial(_dist_linear_kernel_ktiled,
                                   compute_dtype=compute_dtype)
        out = pl.pallas_call(
            kernel,
            out_shape=out_shape,
            grid_spec=pltpu.PrefetchScalarGridSpec(
                num_scalar_prefetch=0,
                grid=(ni, nj, nk),
                in_specs=[
                    pl.BlockSpec((bn, tk), lambda i, j, k: (i, k)),    # x tile
                    pl.BlockSpec((tk, bc), lambda i, j, k: (k, j)),    # w tile
                ],
                out_specs=pl.BlockSpec((bn, bc), lambda i, j, k: (i, j)),
                scratch_shapes=[
                    pltpu.VMEM((bn, bc), jnp.float32),    # f32 score accumulator
                    pltpu.VMEM((bn, 1), jnp.float32),     # per-row sum(x^2)
                ],
            ),
            compiler_params=pltpu.CompilerParams(
                dimension_semantics=("parallel", "parallel", "arbitrary"),
                vmem_limit_bytes=vmem_limit),
        )(x, w_t)

    return out if c_pad == C else out[:, :C]


def reference(x, weight_v, weight_g):
    scale = 2.0 if weight_v.shape[0] <= 200 else 10.0
    x_norm = jnp.linalg.norm(x, axis=1, keepdims=True)
    x_n = x / (x_norm + 1e-5)
    v_norm = jnp.linalg.norm(weight_v, axis=1, keepdims=True)
    w = weight_v * (weight_g / v_norm)
    return scale * (x_n @ w.T)


if __name__ == "__main__":
    key = jax.random.PRNGKey(0)
    k1, k2, k3, k4 = jax.random.split(key, 4)

    # ---- Test 1: small shapes (batch=16, indim=128, outdim=16 -> scale 2).
    # Exercises the no-K-tiling kernel with a resident, single-buffered weight.
    N, indim, outdim = 16, 128, 16
    x = jax.random.normal(k1, (N, indim), dtype=jnp.float32)
    bound = 1.0 / jnp.sqrt(jnp.float32(indim))
    weight_v = jax.random.uniform(k2, (outdim, indim), dtype=jnp.float32,
                                  minval=-bound, maxval=bound)
    weight_g = jnp.linalg.norm(weight_v, axis=1, keepdims=True)

    out = jax.block_until_ready(dist_linear(x, weight_v, weight_g))
    ref = reference(x, weight_v, weight_g)
    assert out.shape == (N, outdim)
    assert jnp.allclose(out, ref, atol=2e-2, rtol=2e-2), "mismatch (test 1)"

    # ---- Test 2: force the K-tiled / class-tiled path (grid 3x3x2, partial
    # last row tile, scale 10) to validate the large-D / v7x code path.
    N2, indim2, outdim2 = 300, 512, 300
    x2 = jax.random.normal(k3, (N2, indim2), dtype=jnp.float32)
    bound2 = 1.0 / jnp.sqrt(jnp.float32(indim2))
    weight_v2 = jax.random.uniform(k4, (outdim2, indim2), dtype=jnp.float32,
                                   minval=-bound2, maxval=bound2)
    weight_g2 = jnp.linalg.norm(weight_v2, axis=1, keepdims=True)

    out2 = jax.block_until_ready(
        dist_linear(x2, weight_v2, weight_g2,
                    block_n=128, block_c=128, block_k=256))
    ref2 = reference(x2, weight_v2, weight_g2)
    assert out2.shape == (N2, outdim2)
    assert jnp.allclose(out2, ref2, atol=2e-2, rtol=2e-2), "mismatch (test 2)"

    print("KERNEL_OK")
</pallas_src>

<mosaic_0001>
module attributes {stable_mosaic.version = 11 : i64} {
  func.func @_dist_linear_kernel(%arg0: i32, %arg1: i32, %arg2: memref<16x128xf32, #tpu.memory_space<vmem>>, %arg3: memref<128x128xbf16, #tpu.memory_space<vmem>>, %arg4: memref<16x128xf32, #tpu.memory_space<vmem>>) attributes {dimension_semantics = [#tpu.dimension_semantics<parallel>, #tpu.dimension_semantics<parallel>], iteration_bounds = array<i64: 1, 1>, scalar_prefetch = 0 : i64, scratch_operands = 0 : i64, tpu.core_type = #tpu.core_type<tc>, window_params = [{transform_indices = @transform_0, window_bounds = array<i64: 16, 128>}, {pipeline_mode = #tpu.pipeline_mode<synchronous>, transform_indices = @transform_1, window_bounds = array<i64: 128, 128>}, {transform_indices = @transform_2, window_bounds = array<i64: 16, 128>}]} {
    %c0 = arith.constant 0 : index
    %c0_0 = arith.constant 0 : index
    %0 = vector.load %arg2[%c0, %c0_0] : memref<16x128xf32, #tpu.memory_space<vmem>>, vector<16x128xf32>
    %1 = arith.mulf %0, %0 : vector<16x128xf32>
    %cst = arith.constant dense<0.000000e+00> : vector<16xf32>
    %2 = vector.multi_reduction <add>, %1, %cst [1] : vector<16x128xf32> to vector<16xf32>
    %3 = vector.shape_cast %2 : vector<16xf32> to vector<16x1xf32>
    %4 = math.sqrt %3 : vector<16x1xf32>
    %cst_1 = arith.constant 9.99999974E-6 : f32
    %5 = vector.broadcast %cst_1 : f32 to vector<16x1xf32>
    %6 = arith.addf %4, %5 : vector<16x1xf32>
    %7 = tpu.reciprocal %6 {approx = true} : vector<16x1xf32> -> vector<16x1xf32>
    %8 = vector.broadcast %7 : vector<16x1xf32> to vector<16x128xf32>
    %9 = arith.mulf %0, %8 : vector<16x128xf32>
    %10 = arith.truncf %9 : vector<16x128xf32> to vector<16x128xbf16>
    %c0_2 = arith.constant 0 : index
    %c0_3 = arith.constant 0 : index
    %11 = vector.load %arg3[%c0_2, %c0_3] : memref<128x128xbf16, #tpu.memory_space<vmem>>, vector<128x128xbf16>
    %cst_4 = arith.constant dense<0.000000e+00> : vector<16x128xf32>
    %12 = tpu.matmul %10, %11, %cst_4 {dimension_numbers = #tpu.dot_dimension_numbers<[1], [0], [0], [1], [0, 0, 1, 1], [], []>} : vector<16x128xbf16>, vector<128x128xbf16>, vector<16x128xf32> -> vector<16x128xf32>
    %c0_5 = arith.constant 0 : index
    %c0_6 = arith.constant 0 : index
    %13 = vector.load %arg4[%c0_5, %c0_6] : memref<16x128xf32, #tpu.memory_space<vmem>>, vector<16x128xf32>
    tpu.vector_store %arg4[%c0_5, %c0_6], %12 {strides = array<i32>} : memref<16x128xf32, #tpu.memory_space<vmem>>, vector<16x128xf32>,
    return
  }
  func.func @transform_0(%arg0: i32, %arg1: i32) -> (i32, i32) {
    %c0_i32 = arith.constant 0 : i32
    %c0_i32_0 = arith.constant 0 : i32
    return %arg0, %c0_i32 : i32, i32
  }
  func.func @transform_1(%arg0: i32, %arg1: i32) -> (i32, i32) {
    %c0_i32 = arith.constant 0 : i32
    %c0_i32_0 = arith.constant 0 : i32
    return %c0_i32, %arg1 : i32, i32
  }
  func.func @transform_2(%arg0: i32, %arg1: i32) -> (i32, i32) {
    %c0_i32 = arith.constant 0 : i32
    return %arg0, %arg1 : i32, i32
  }
}

module attributes {stable_mosaic.version = 11 : i64} {
  func.func @_dist_linear_kernel(%arg0: i32, %arg1: i32, %arg2: memref<16x128xf32, #tpu.memory_space<vmem>>, %arg3: memref<128x128xbf16, #tpu.memory_space<vmem>>, %arg4: memref<16x128xf32, #tpu.memory_space<vmem>>) attributes {dimension_semantics = [#tpu.dimension_semantics<parallel>, #tpu.dimension_semantics<parallel>], iteration_bounds = array<i64: 1, 1>, scalar_prefetch = 0 : i64, scratch_operands = 0 : i64, tpu.core_type = #tpu.core_type<tc>, window_params = [{transform_indices = @transform_0, window_bounds = array<i64: 16, 128>}, {transform_indices = @transform_1, window_bounds = array<i64: 128, 128>}, {transform_indices = @transform_2, window_bounds = array<i64: 16, 128>}]} {
    %c0 = arith.constant 0 : index
    %c0_0 = arith.constant 0 : index
    %0 = vector.load %arg2[%c0, %c0_0] : memref<16x128xf32, #tpu.memory_space<vmem>>, vector<16x128xf32>
    %1 = arith.mulf %0, %0 : vector<16x128xf32>
    %cst = arith.constant dense<0.000000e+00> : vector<16xf32>
    %2 = vector.multi_reduction <add>, %1, %cst [1] : vector<16x128xf32> to vector<16xf32>
    %3 = vector.shape_cast %2 : vector<16xf32> to vector<16x1xf32>
    %4 = math.sqrt %3 : vector<16x1xf32>
    %cst_1 = arith.constant 9.99999974E-6 : f32
    %5 = vector.broadcast %cst_1 : f32 to vector<16x1xf32>
    %6 = arith.addf %4, %5 : vector<16x1xf32>
    %7 = tpu.reciprocal %6 {approx = true} : vector<16x1xf32> -> vector<16x1xf32>
    %8 = vector.broadcast %7 : vector<16x1xf32> to vector<16x128xf32>
    %9 = arith.mulf %0, %8 : vector<16x128xf32>
    %10 = arith.truncf %9 : vector<16x128xf32> to vector<16x128xbf16>
    %c0_2 = arith.constant 0 : index
    %c0_3 = arith.constant 0 : index
    %11 = vector.load %arg3[%c0_2, %c0_3] : memref<128x128xbf16, #tpu.memory_space<vmem>>, vector<128x128xbf16>
    %cst_4 = arith.constant dense<0.000000e+00> : vector<16x128xf32>
    %12 = tpu.matmul %10, %11, %cst_4 {dimension_numbers = #tpu.dot_dimension_numbers<[1], [0], [0], [1], [0, 0, 1, 1], [], []>} : vector<16x128xbf16>, vector<128x128xbf16>, vector<16x128xf32> -> vector<16x128xf32>
    %c0_5 = arith.constant 0 : index
    %c0_6 = arith.constant 0 : index
    %13 = vector.load %arg4[%c0_5, %c0_6] : memref<16x128xf32, #tpu.memory_space<vmem>>, vector<16x128xf32>
    tpu.vector_store %arg4[%c0_5, %c0_6], %12 {strides = array<i32>} : memref<16x128xf32, #tpu.memory_space<vmem>>, vector<16x128xf32>,
    return
  }
  func.func @transform_0(%arg0: i32, %arg1: i32) -> (i32, i32) {
    %c0_i32 = arith.constant 0 : i32
    %c0_i32_0 = arith.constant 0 : i32
    return %arg0, %c0_i32 : i32, i32
  }
  func.func @transform_1(%arg0: i32, %arg1: i32) -> (i32, i32) {
    %c0_i32 = arith.constant 0 : i32
    %c0_i32_0 = arith.constant 0 : i32
    return %c0_i32, %arg1 : i32, i32
  }
  func.func @transform_2(%arg0: i32, %arg1: i32) -> (i32, i32) {
    %c0_i32 = arith.constant 0 : i32
    return %arg0, %arg1 : i32, i32
  }
}

</mosaic_0001>

<llo_original>
// kernel: tpu_custom_call.1
$region0: #{tpu_custom_call.1}
  #allocation0 [shape = 'u32[]', space=smem, size = 0x4, offset = 0x4, fixed_abs, tag = 'smem constant byte address 0x4 - core index']
  #allocation1 [shape = 'u32[144,128]{1,0:T(1,128)}', space=vmem, size = 0x12000, scoped, tag = 'internal scratch']
  %s0 = inlined_call_operand.hbm [shape: f32[16,128], index: 0, kind: input, shape index: {}]
  %s1 = inlined_call_operand.hbm [shape: bf16[128,128], index: 1, kind: input, shape index: {}]
  %s2 = inlined_call_operand.hbm [shape: f32[16,128], index: 2, kind: output, shape index: {}]
  %s3 = sld [smem:[#allocation0]]
  $region26: #{tpu_custom_call.1} parent=0
    _
  %s5 = ssub.s32 1, %s3
  %s6 = scalar_select 0, %s5, %s3
  $region1: #{tpu_custom_call.1} parent=0
    #allocation2 [shape = 'u8[8192]{0}', space=vmem, size = 0x2000, scoped, tag = 'input window, operand 0, single buffered']
    #allocation3 [shape = 's32[1]{0}', space=sflag, size = 0x4, scoped, tag = 'scoped memory for tpu_custom_call.1']
    #allocation4 [shape = 's32[1]{0}', space=sflag, size = 0x4, scoped, tag = 'scoped memory for tpu_custom_call.1']
    #allocation5 [shape = 'u8[32768]{0}', space=vmem, size = 0x8000, scoped, tag = 'input window, operand 1, single buffered']
    #allocation6 [shape = 's32[1]{0}', space=sflag, size = 0x4, scoped, tag = 'scoped memory for tpu_custom_call.1']
    #allocation7 [shape = 'u8[8192]{0}', space=vmem, size = 0x2000, scoped, tag = 'output window, operand 0, single buffered']
    %7 = vsyncpa [#allocation3], 0
    %8 = vsyncpa [#allocation6], 0
    %9 = vsyncpa [#allocation4], 0
    // Predicated region
    $region2: #{tpu_custom_call.1} parent=1 // pred_check
      _
    $region3: #{tpu_custom_call.1} parent=1 // pred_check_branch
      %11 = sbr.rel (0) target = $region5
    $region4: #{tpu_custom_call.1} parent=1 // pred_region
      %s13 = ssub.s32 256, 256
      %14 = vsyncadd [#allocation3], %s13
      %s15 = sshll.u32 [#allocation2], 4
      %s16 = int_to_ptr.vmem [resolvable:$true] %s15
      %21 = dma.hbm_to_vmem [thread:$0]  %s0, 256, %s16, [#allocation3], 128, 128, 8
    $region5: #{tpu_custom_call.1} parent=1 // pred_fallthru
      _
    // Predicated region
    $region6: #{tpu_custom_call.1} parent=1 // pred_check
      _
    $region7: #{tpu_custom_call.1} parent=1 // pred_check_branch
      %23 = sbr.rel (0) target = $region9
    $region8: #{tpu_custom_call.1} parent=1 // pred_region
      %s25 = ssub.s32 1024, 1024
      %26 = vsyncadd [#allocation6], %s25
      %s27 = sshll.u32 [#allocation5], 4
      %s28 = int_to_ptr.vmem [resolvable:$true] %s27
      %33 = dma.hbm_to_vmem [thread:$0]  %s1, 1024, %s28, [#allocation6], 64, 64, 4
    $region9: #{tpu_custom_call.1} parent=1 // pred_fallthru
      _
    // Predicated region
    $region10: #{tpu_custom_call.1} parent=1 // pred_check
      _
    $region11: #{tpu_custom_call.1} parent=1 // pred_check_branch
      %35 = sbr.rel (0) target = $region13
    $region12: #{tpu_custom_call.1} parent=1 // pred_region
      %36 = dma.done [#allocation3], 256
    $region13: #{tpu_custom_call.1} parent=1 // pred_fallthru
      _
    // Predicated region
    $region14: #{tpu_custom_call.1} parent=1 // pred_check
      _
    $region15: #{tpu_custom_call.1} parent=1 // pred_check_branch
      %38 = sbr.rel (0) target = $region17
    $region16: #{tpu_custom_call.1} parent=1 // pred_region
      %39 = dma.done [#allocation6], 1024
    $region17: #{tpu_custom_call.1} parent=1 // pred_fallthru
      _
    %v41 = vld [vmem:[#allocation2] sm:$0xff]
    %v42 = vld [vmem:[#allocation2 + $0x8] sm:$0xff]
    %v43 = vmul.f32 %v41, %v41
    %v44 = vmul.f32 %v42, %v42
    %45 = vadd.xlane.f32.xlu0 %v43
    %v46 = vpop.xlane.xlu0 %45
    %47 = vadd.xlane.f32.xlu0 %v44
    %v48 = vpop.xlane.xlu0 %47
    %v49 = vrsqrt.pop %v46
    %v50 = vmul.f32 %v46, %v49
    %vm51 = vcmp.eq.f32.partialorder %v46, inf
    %v52 = vsel %vm51, %v46, %v50
    %vm53 = vcmp.eq.f32.partialorder %v46, 0.0
    %v54 = vand.u32 %v46, 2147483648
    %v55 = vsel %vm53, %v54, %v52
    %v56 = vrsqrt.pop %v48
    %v57 = vmul.f32 %v48, %v56
    %vm58 = vcmp.eq.f32.partialorder %v48, inf
    %v59 = vsel %vm58, %v48, %v57
    %vm60 = vcmp.eq.f32.partialorder %v48, 0.0
    %v61 = vand.u32 %v48, 2147483648
    %v62 = vsel %vm60, %v61, %v59
    %v63 = vadd.f32 %v55, 1e-05
    %v64 = vadd.f32 %v62, 1e-05
    %v65 = vrcp.pop %v63
    %v66 = vrcp.pop %v64
    %v67 = vmul.f32 %v41, %v65
    %v68 = vmul.f32 %v42, %v66
    %v69 = vpack.c.bf16 %v68, %v67
    %v70 = vld [vmem:[#allocation5] sm:$0xf]
    %v71 = vld [vmem:[#allocation5 + $0x4] sm:$0xf]
    %v72 = vld [vmem:[#allocation5 + $0x8] sm:$0xf]
    %v73 = vld [vmem:[#allocation5 + $0xc] sm:$0xf]
    %v74 = vld [vmem:[#allocation5 + $0x10] sm:$0xf]
    %v75 = vld [vmem:[#allocation5 + $0x14] sm:$0xf]
    %v76 = vld [vmem:[#allocation5 + $0x18] sm:$0xf]
    %v77 = vld [vmem:[#allocation5 + $0x1c] sm:$0xf]
    %v78 = vld [vmem:[#allocation5 + $0x20] sm:$0xf]
    %v79 = vld [vmem:[#allocation5 + $0x24] sm:$0xf]
    %v80 = vld [vmem:[#allocation5 + $0x28] sm:$0xf]
    %v81 = vld [vmem:[#allocation5 + $0x2c] sm:$0xf]
    %v82 = vld [vmem:[#allocation5 + $0x30] sm:$0xf]
    %v83 = vld [vmem:[#allocation5 + $0x34] sm:$0xf]
    %v84 = vld [vmem:[#allocation5 + $0x38] sm:$0xf]
    %v85 = vld [vmem:[#allocation5 + $0x3c] sm:$0xf]
    %v102 = vunpack.c.l.b16 %v70
    %v103 = vunpack.c.l.b16 %v71
    %v104 = vunpack.c.l.b16 %v72
    %v105 = vunpack.c.l.b16 %v73
    %v106 = vunpack.c.l.b16 %v74
    %v107 = vunpack.c.l.b16 %v75
    %v108 = vunpack.c.l.b16 %v76
    %v109 = vunpack.c.l.b16 %v77
    %v110 = vunpack.c.l.b16 %v78
    %v111 = vunpack.c.l.b16 %v79
    %v112 = vunpack.c.l.b16 %v80
    %v113 = vunpack.c.l.b16 %v81
    %v114 = vunpack.c.l.b16 %v82
    %v115 = vunpack.c.l.b16 %v83
    %v116 = vunpack.c.l.b16 %v84
    %v117 = vunpack.c.l.b16 %v85
    %v118 = vpack.c.b16 %v103, %v102
    %v119 = vpack.c.b16 %v105, %v104
    %v120 = vpack.c.b16 %v107, %v106
    %v121 = vpack.c.b16 %v109, %v108
    %v122 = vpack.c.b16 %v111, %v110
    %v123 = vpack.c.b16 %v113, %v112
    %v124 = vpack.c.b16 %v115, %v114
    %v125 = vpack.c.b16 %v117, %v116
    %134 = vmatprep.subr.bf16.mxu0 0
    %135 = vmatpush1.bf16.msra.mxu0 %v118
    %136 = vmatprep.subr.bf16.mxu0 0
    %137 = vmatpush1.bf16.msra.mxu0 %v119
    %138 = vmatprep.subr.bf16.mxu0 0
    %139 = vmatpush1.bf16.msra.mxu0 %v120
    %140 = vmatprep.subr.bf16.mxu0 0
    %141 = vmatpush1.bf16.msra.mxu0 %v121
    %142 = vmatprep.subr.bf16.mxu0 0
    %143 = vmatpush1.bf16.msra.mxu0 %v122
    %144 = vmatprep.subr.bf16.mxu0 0
    %145 = vmatpush1.bf16.msra.mxu0 %v123
    %146 = vmatprep.subr.bf16.mxu0 0
    %147 = vmatpush1.bf16.msra.mxu0 %v124
    %148 = vmatprep.subr.bf16.mxu0 0
    %149 = vmatpush1.bf16.msra.mxu0 %v125
    %150 = vmatprep.subr.bf16.mxu0 0
    %151 = vmatpush1.bf16.msra.mxu0 0
    %152 = vmatprep.subr.bf16.mxu0 0
    %153 = vmatpush1.bf16.msra.mxu0 0
    %154 = vmatprep.subr.bf16.mxu0 0
    %155 = vmatpush1.bf16.msra.mxu0 0
    %156 = vmatprep.subr.bf16.mxu0 0
    %157 = vmatpush1.bf16.msra.mxu0 0
    %158 = vmatprep.subr.bf16.mxu0 0
    %159 = vmatpush1.bf16.msra.mxu0 0
    %160 = vmatprep.subr.bf16.mxu0 0
    %161 = vmatpush1.bf16.msra.mxu0 0
    %162 = vmatprep.subr.bf16.mxu0 0
    %163 = vmatpush1.bf16.msra.mxu0 0
    %164 = vmatprep.subr.bf16.mxu0 0
    %165 = vmatpush1.bf16.msra.mxu0 0
    %166 = vmatprep.mubr.bf16.mxu0 0
    %167 = vmatmul.mubr.bf16.gmra.mrb[0].mxu0 %v69
    %v168 = vpop.f32.mrb[0].mxu0
    %v169 = vadd.f32 0.0, %v168
    %v170 = vpop.f32.mrb[0].mxu0
    %v171 = vpop.f32.mrb[0].mxu0
    %v172 = vadd.f32 0.0, %v171
    %v173 = vpop.f32.mrb[0].mxu0
    %174 = vdwg.mxu0
    %175 = vst [vmem:[#allocation7] sm:$0xff] %v169
    %176 = vst [vmem:[#allocation7 + $0x8] sm:$0xff] %v172
    // Predicated region
    $region18: #{tpu_custom_call.1} parent=1 // pred_check
      _
    $region19: #{tpu_custom_call.1} parent=1 // pred_check_branch
      %178 = sbr.rel (0) target = $region21
    $region20: #{tpu_custom_call.1} parent=1 // pred_region
      %s180 = ssub.s32 256, 256
      %181 = vsyncadd [#allocation4], %s180
      %s182 = sshll.u32 [#allocation7], 4
      %s183 = int_to_ptr.vmem [resolvable:$true] %s182
      %188 = dma.vmem_to_hbm [thread:$0]  %s183, 256, %s2, [#allocation4], 128, 128, 8
    $region21: #{tpu_custom_call.1} parent=1 // pred_fallthru
      _
    // Predicated region
    $region22: #{tpu_custom_call.1} parent=1 // pred_check
      _
    $region23: #{tpu_custom_call.1} parent=1 // pred_check_branch
      %190 = sbr.rel (0) target = $region25
    $region24: #{tpu_custom_call.1} parent=1 // pred_region
      %191 = dma.done [#allocation4], 256
    $region25: #{tpu_custom_call.1} parent=1 // pred_fallthru
      _
    %192 = vsyncpa [#allocation3], 1
    %193 = vsyncpa [#allocation6], 1
    %194 = vsyncpa [#allocation4], 1

// kernel: tpu_custom_call.1
$region0: #{tpu_custom_call.1}
  #allocation0 [shape = 'u32[]', space=smem, size = 0x4, offset = 0x4, fixed_abs, tag = 'smem constant byte address 0x4 - core index']
  #allocation1 [shape = 'u32[144,128]{1,0:T(1,128)}', space=vmem, size = 0x12000, scoped, tag = 'internal scratch']
  %s0 = inlined_call_operand.hbm [shape: f32[16,128], index: 0, kind: input, shape index: {}]
  %s1 = inlined_call_operand.hbm [shape: bf16[128,128], index: 1, kind: input, shape index: {}]
  %s2 = inlined_call_operand.hbm [shape: f32[16,128], index: 2, kind: output, shape index: {}]
  %s3 = sld [smem:[#allocation0]]
  $region26: #{tpu_custom_call.1} parent=0
    _
  %s5 = ssub.s32 1, %s3
  %s6 = scalar_select 0, %s5, %s3
  $region1: #{tpu_custom_call.1} parent=0
    #allocation2 [shape = 'u8[8192]{0}', space=vmem, size = 0x2000, scoped, tag = 'input window, operand 0, single buffered']
    #allocation3 [shape = 's32[1]{0}', space=sflag, size = 0x4, scoped, tag = 'scoped memory for tpu_custom_call.1']
    #allocation4 [shape = 's32[1]{0}', space=sflag, size = 0x4, scoped, tag = 'scoped memory for tpu_custom_call.1']
    #allocation5 [shape = 'u8[32768]{0}', space=vmem, size = 0x8000, scoped, tag = 'input window, operand 1, single buffered']
    #allocation6 [shape = 's32[1]{0}', space=sflag, size = 0x4, scoped, tag = 'scoped memory for tpu_custom_call.1']
    #allocation7 [shape = 'u8[8192]{0}', space=vmem, size = 0x2000, scoped, tag = 'output window, operand 0, single buffered']
    %7 = vsyncpa [#allocation3], 0
    %8 = vsyncpa [#allocation6], 0
    %9 = vsyncpa [#allocation4], 0
    // Predicated region
    $region2: #{tpu_custom_call.1} parent=1 // pred_check
      _
    $region3: #{tpu_custom_call.1} parent=1 // pred_check_branch
      %11 = sbr.rel (0) target = $region5
    $region4: #{tpu_custom_call.1} parent=1 // pred_region
      %s13 = ssub.s32 256, 256
      %14 = vsyncadd [#allocation3], %s13
      %s15 = sshll.u32 [#allocation2], 4
      %s16 = int_to_ptr.vmem [resolvable:$true] %s15
      %21 = dma.hbm_to_vmem [thread:$0]  %s0, 256, %s16, [#allocation3], 128, 128, 8
    $region5: #{tpu_custom_call.1} parent=1 // pred_fallthru
      _
    // Predicated region
    $region6: #{tpu_custom_call.1} parent=1 // pred_check
      _
    $region7: #{tpu_custom_call.1} parent=1 // pred_check_branch
      %23 = sbr.rel (0) target = $region9
    $region8: #{tpu_custom_call.1} parent=1 // pred_region
      %s25 = ssub.s32 1024, 1024
      %26 = vsyncadd [#allocation6], %s25
      %s27 = sshll.u32 [#allocation5], 4
      %s28 = int_to_ptr.vmem [resolvable:$true] %s27
      %33 = dma.hbm_to_vmem [thread:$0]  %s1, 1024, %s28, [#allocation6], 64, 64, 4
    $region9: #{tpu_custom_call.1} parent=1 // pred_fallthru
      _
    // Predicated region
    $region10: #{tpu_custom_call.1} parent=1 // pred_check
      _
    $region11: #{tpu_custom_call.1} parent=1 // pred_check_branch
      %35 = sbr.rel (0) target = $region13
    $region12: #{tpu_custom_call.1} parent=1 // pred_region
      %36 = dma.done [#allocation3], 256
    $region13: #{tpu_custom_call.1} parent=1 // pred_fallthru
      _
    // Predicated region
    $region14: #{tpu_custom_call.1} parent=1 // pred_check
      _
    $region15: #{tpu_custom_call.1} parent=1 // pred_check_branch
      %38 = sbr.rel (0) target = $region17
    $region16: #{tpu_custom_call.1} parent=1 // pred_region
      %39 = dma.done [#allocation6], 1024
    $region17: #{tpu_custom_call.1} parent=1 // pred_fallthru
      _
    %v41 = vld [vmem:[#allocation2] sm:$0xff]
    %v42 = vld [vmem:[#allocation2 + $0x8] sm:$0xff]
    %v43 = vmul.f32 %v41, %v41
    %v44 = vmul.f32 %v42, %v42
    %45 = vadd.xlane.f32.xlu0 %v43
    %v46 = vpop.xlane.xlu0 %45
    %47 = vadd.xlane.f32.xlu0 %v44
    %v48 = vpop.xlane.xlu0 %47
    %v49 = vrsqrt.pop %v46
    %v50 = vmul.f32 %v46, %v49
    %vm51 = vcmp.eq.f32.partialorder %v46, inf
    %v52 = vsel %vm51, %v46, %v50
    %vm53 = vcmp.eq.f32.partialorder %v46, 0.0
    %v54 = vand.u32 %v46, 2147483648
    %v55 = vsel %vm53, %v54, %v52
    %v56 = vrsqrt.pop %v48
    %v57 = vmul.f32 %v48, %v56
    %vm58 = vcmp.eq.f32.partialorder %v48, inf
    %v59 = vsel %vm58, %v48, %v57
    %vm60 = vcmp.eq.f32.partialorder %v48, 0.0
    %v61 = vand.u32 %v48, 2147483648
    %v62 = vsel %vm60, %v61, %v59
    %v63 = vadd.f32 %v55, 1e-05
    %v64 = vadd.f32 %v62, 1e-05
    %v65 = vrcp.pop %v63
    %v66 = vrcp.pop %v64
    %v67 = vmul.f32 %v41, %v65
    %v68 = vmul.f32 %v42, %v66
    %v69 = vpack.c.bf16 %v68, %v67
    %v70 = vld [vmem:[#allocation5] sm:$0xf]
    %v71 = vld [vmem:[#allocation5 + $0x4] sm:$0xf]
    %v72 = vld [vmem:[#allocation5 + $0x8] sm:$0xf]
    %v73 = vld [vmem:[#allocation5 + $0xc] sm:$0xf]
    %v74 = vld [vmem:[#allocation5 + $0x10] sm:$0xf]
    %v75 = vld [vmem:[#allocation5 + $0x14] sm:$0xf]
    %v76 = vld [vmem:[#allocation5 + $0x18] sm:$0xf]
    %v77 = vld [vmem:[#allocation5 + $0x1c] sm:$0xf]
    %v78 = vld [vmem:[#allocation5 + $0x20] sm:$0xf]
    %v79 = vld [vmem:[#allocation5 + $0x24] sm:$0xf]
    %v80 = vld [vmem:[#allocation5 + $0x28] sm:$0xf]
    %v81 = vld [vmem:[#allocation5 + $0x2c] sm:$0xf]
    %v82 = vld [vmem:[#allocation5 + $0x30] sm:$0xf]
    %v83 = vld [vmem:[#allocation5 + $0x34] sm:$0xf]
    %v84 = vld [vmem:[#allocation5 + $0x38] sm:$0xf]
    %v85 = vld [vmem:[#allocation5 + $0x3c] sm:$0xf]
    %v102 = vunpack.c.l.b16 %v70
    %v103 = vunpack.c.l.b16 %v71
    %v104 = vunpack.c.l.b16 %v72
    %v105 = vunpack.c.l.b16 %v73
    %v106 = vunpack.c.l.b16 %v74
    %v107 = vunpack.c.l.b16 %v75
    %v108 = vunpack.c.l.b16 %v76
    %v109 = vunpack.c.l.b16 %v77
    %v110 = vunpack.c.l.b16 %v78
    %v111 = vunpack.c.l.b16 %v79
    %v112 = vunpack.c.l.b16 %v80
    %v113 = vunpack.c.l.b16 %v81
    %v114 = vunpack.c.l.b16 %v82
    %v115 = vunpack.c.l.b16 %v83
    %v116 = vunpack.c.l.b16 %v84
    %v117 = vunpack.c.l.b16 %v85
    %v118 = vpack.c.b16 %v103, %v102
    %v119 = vpack.c.b16 %v105, %v104
    %v120 = vpack.c.b16 %v107, %v106
    %v121 = vpack.c.b16 %v109, %v108
    %v122 = vpack.c.b16 %v111, %v110
    %v123 = vpack.c.b16 %v113, %v112
    %v124 = vpack.c.b16 %v115, %v114
    %v125 = vpack.c.b16 %v117, %v116
    %134 = vmatprep.subr.bf16.mxu0 0
    %135 = vmatpush1.bf16.msra.mxu0 %v118
    %136 = vmatprep.subr.bf16.mxu0 0
    %137 = vmatpush1.bf16.msra.mxu0 %v119
    %138 = vmatprep.subr.bf16.mxu0 0
    %139 = vmatpush1.bf16.msra.mxu0 %v120
    %140 = vmatprep.subr.bf16.mxu0 0
    %141 = vmatpush1.bf16.msra.mxu0 %v121
    %142 = vmatprep.subr.bf16.mxu0 0
    %143 = vmatpush1.bf16.msra.mxu0 %v122
    %144 = vmatprep.subr.bf16.mxu0 0
    %145 = vmatpush1.bf16.msra.mxu0 %v123
    %146 = vmatprep.subr.bf16.mxu0 0
    %147 = vmatpush1.bf16.msra.mxu0 %v124
    %148 = vmatprep.subr.bf16.mxu0 0
    %149 = vmatpush1.bf16.msra.mxu0 %v125
    %150 = vmatprep.subr.bf16.mxu0 0
    %151 = vmatpush1.bf16.msra.mxu0 0
    %152 = vmatprep.subr.bf16.mxu0 0
    %153 = vmatpush1.bf16.msra.mxu0 0
    %154 = vmatprep.subr.bf16.mxu0 0
    %155 = vmatpush1.bf16.msra.mxu0 0
    %156 = vmatprep.subr.bf16.mxu0 0
    %157 = vmatpush1.bf16.msra.mxu0 0
    %158 = vmatprep.subr.bf16.mxu0 0
    %159 = vmatpush1.bf16.msra.mxu0 0
    %160 = vmatprep.subr.bf16.mxu0 0
    %161 = vmatpush1.bf16.msra.mxu0 0
    %162 = vmatprep.subr.bf16.mxu0 0
    %163 = vmatpush1.bf16.msra.mxu0 0
    %164 = vmatprep.subr.bf16.mxu0 0
    %165 = vmatpush1.bf16.msra.mxu0 0
    %166 = vmatprep.mubr.bf16.mxu0 0
    %167 = vmatmul.mubr.bf16.gmra.mrb[0].mxu0 %v69
    %v168 = vpop.f32.mrb[0].mxu0
    %v169 = vadd.f32 0.0, %v168
    %v170 = vpop.f32.mrb[0].mxu0
    %v171 = vpop.f32.mrb[0].mxu0
    %v172 = vadd.f32 0.0, %v171
    %v173 = vpop.f32.mrb[0].mxu0
    %174 = vdwg.mxu0
    %175 = vst [vmem:[#allocation7] sm:$0xff] %v169
    %176 = vst [vmem:[#allocation7 + $0x8] sm:$0xff] %v172
    // Predicated region
    $region18: #{tpu_custom_call.1} parent=1 // pred_check
      _
    $region19: #{tpu_custom_call.1} parent=1 // pred_check_branch
      %178 = sbr.rel (0) target = $region21
    $region20: #{tpu_custom_call.1} parent=1 // pred_region
      %s180 = ssub.s32 256, 256
      %181 = vsyncadd [#allocation4], %s180
      %s182 = sshll.u32 [#allocation7], 4
      %s183 = int_to_ptr.vmem [resolvable:$true] %s182
      %188 = dma.vmem_to_hbm [thread:$0]  %s183, 256, %s2, [#allocation4], 128, 128, 8
    $region21: #{tpu_custom_call.1} parent=1 // pred_fallthru
      _
    // Predicated region
    $region22: #{tpu_custom_call.1} parent=1 // pred_check
      _
    $region23: #{tpu_custom_call.1} parent=1 // pred_check_branch
      %190 = sbr.rel (0) target = $region25
    $region24: #{tpu_custom_call.1} parent=1 // pred_region
      %191 = dma.done [#allocation4], 256
    $region25: #{tpu_custom_call.1} parent=1 // pred_fallthru
      _
    %192 = vsyncpa [#allocation3], 1
    %193 = vsyncpa [#allocation6], 1
    %194 = vsyncpa [#allocation4], 1

</llo_original>
